<compile_context>
chip_gen: v6e
topology: v6e:2x2x1
jax: 0.10.0
libtpu: 0.0.40
codegen_flags: <defaults>
</compile_context>

<pallas_src>
import math
from functools import partial

import jax
import jax.numpy as jnp
from jax.experimental import pallas as pl
from jax.experimental.pallas import tpu as pltpu


def _round_up(x, m):
    return (x + m - 1) // m * m


def _vmem_budget_bytes():
    try:
        cap = int(pltpu.get_tpu_info().vmem_capacity_bytes)
    except Exception:
        cap = 64 * 1024 * 1024                      # conservative (v7x per-TC)
    # ~3/4 of physical VMEM: ~96 MiB on v5e/v6e (128 MiB), ~48 MiB on v7x.
    return min(cap * 3 // 4, 112 * 1024 * 1024)


def _choose_row_tile(Ho, Wo, Cin, Cout, W, in_itemsize, w_itemsize, budget, n_batches):
    """Output rows per block (always a multiple of 8)."""
    # Bytes that scale with the number of output rows in a tile:
    #   input block (double-buffered + live value), output block (double
    #   buffered) + f32 accumulator, pooled scratch + pool-matmul result.
    per_row = (Cin * 2 * W * in_itemsize * 3
               + Cout * Wo * (in_itemsize * 2 + 4)
               + 2 * Cin * Wo * in_itemsize)
    # Resident operands are double-buffered by the pipeline even with a
    # constant index_map, so count them twice; keep ~2 MiB headroom.
    fixed = (Cout * Cin * w_itemsize * 2            # folded conv weight
             + 2 * W * Wo * w_itemsize * 2          # pool selector
             + Cout * 4 * 2                         # bias
             + (2 << 20))
    avail = max(budget - fixed, per_row * 8)
    max_rows = max((avail // per_row) // 8 * 8, 8)

    tho_full = _round_up(Ho, 8)
    if tho_full <= min(max_rows, 128):
        tho = tho_full                              # all rows of an image in one tile
    else:
        # Multi-tile in H: the lane-dense output tile (THo*Wo) must be a
        # multiple of 128 lanes.
        align = math.lcm(8, 128 // math.gcd(Wo, 128))
        tho = max(align, min(max_rows, 128) // align * align)

    # Keep >= 2 grid steps so both v7x TensorCores get work (and the pipeline
    # overlaps DMA with compute) even when N == 1.
    if n_batches * pl.cdiv(Ho, tho) < 2:
        align = math.lcm(8, 128 // math.gcd(Wo, 128))
        half = _round_up(pl.cdiv(Ho, 2), align)
        if half < tho:
            tho = half
    return tho


def _pool_conv_kernel(x_ref, s_ref, w_ref, b_ref, o_ref, pooled_ref, *, tho, wo):
    """One (batch, row-tile) step: fused 2x2 avg-pool + 1x1 conv.

    x_ref:      (Cin, THo, 2W)   row-pair view of the NCHW input tile
    s_ref:      (2W, Wo)         0/1 selector summing the four pool taps
    w_ref:      (Cout, Cin)      conv weight with the 1/4 average folded in
    b_ref:      (Cout, 1)        conv bias (f32)
    o_ref:      (Cout, THo*Wo)   lane-dense output tile
    pooled_ref: (Cin, THo*Wo)    VMEM scratch holding the repacked pooled tile
    """
    cin = x_ref.shape[0]
    two_w = x_ref.shape[2]
    # (Cin, THo, 2W) -> (Cin*THo, 2W): layout-trivial (THo is a multiple of 8).
    v = x_ref[...].reshape(cin * tho, two_w)
    # Both pooling taps in one MXU matmul against the 0/1 selector.
    vp = jnp.dot(v, s_ref[...], preferred_element_type=v.dtype)   # (Cin*THo, Wo)
    vp = vp.reshape(cin, tho, wo)                                  # layout-trivial split
    # Repack rows onto the lane axis so the conv matmul sees (Cin, THo*Wo).
    for h in range(tho):                                           # static unroll
        pooled_ref[:, h * wo:(h + 1) * wo] = vp[:, h, :]
    y = jnp.dot(w_ref[...], pooled_ref[...], preferred_element_type=jnp.float32)
    y = y + b_ref[...]
    o_ref[...] = y.astype(o_ref.dtype)


def _conv1x1_kernel(x_ref, w_ref, b_ref, o_ref):
    y = jnp.dot(w_ref[...], x_ref[...], preferred_element_type=jnp.float32)
    o_ref[...] = (y + b_ref[...]).astype(o_ref.dtype)


@partial(jax.jit, static_argnames=("stride", "dilation"))
def downsample(x_nchw, w_oihw=None, bias=None, *, stride=2, dilation=1):
    """Forward of Downsample. x_nchw: (N, Cin, H, W); w_oihw: (Cout, Cin, 1, 1)."""
    N, Cin, H, W = x_nchw.shape
    do_pool = (stride > 1) or (dilation > 1)
    if not do_pool and w_oihw is None:
        return x_nchw                                    # Identity + Identity

    compute_dtype = x_nchw.dtype
    if w_oihw is None:                                   # pool only (in_chs == out_chs)
        Cout = Cin
        w_mat = jnp.eye(Cin, dtype=jnp.float32)
    else:
        Cout = w_oihw.shape[0]
        w_mat = w_oihw.reshape(Cout, Cin).astype(jnp.float32)
    b_vec = (jnp.zeros((Cout,), jnp.float32) if bias is None
             else bias.astype(jnp.float32))
    b2 = b_vec.reshape(Cout, 1)

    in_itemsize = jnp.dtype(compute_dtype).itemsize
    budget = _vmem_budget_bytes()

    if not do_pool:
        # 1x1 conv only (stride == 1, dilation == 1, in_chs != out_chs).
        P = H * W
        xv = x_nchw.reshape(N, Cin, P)
        w_fold = w_mat.astype(compute_dtype)
        per_col = Cin * in_itemsize * 3 + Cout * (in_itemsize * 2 + 4)
        fixed = Cout * Cin * in_itemsize * 2 + Cout * 8 + (2 << 20)
        max_cols = max((budget - fixed) // per_col, 128)
        if P <= max_cols:
            tp = P
            if N == 1 and P >= 256:
                tp = _round_up(pl.cdiv(P, 2), 128)       # keep both v7x cores busy
        else:
            tp = max(128, min(max_cols, 1 << 16) // 128 * 128)
        out = pl.pallas_call(
            _conv1x1_kernel,
            out_shape=jax.ShapeDtypeStruct((N, Cout, P), compute_dtype),
            grid_spec=pltpu.PrefetchScalarGridSpec(
                num_scalar_prefetch=0,
                grid=(N, pl.cdiv(P, tp)),
                in_specs=[
                    pl.BlockSpec((None, Cin, tp), lambda n, p: (n, 0, p)),
                    pl.BlockSpec((Cout, Cin), lambda n, p: (0, 0)),
                    pl.BlockSpec((Cout, 1), lambda n, p: (0, 0)),
                ],
                out_specs=pl.BlockSpec((None, Cout, tp), lambda n, p: (n, 0, p)),
            ),
            compiler_params=pltpu.CompilerParams(
                dimension_semantics=("parallel", "parallel"),
                vmem_limit_bytes=budget),
        )(xv, w_fold, b2)
        return out.reshape(N, Cout, H, W)

    # ---- AvgPool2d(2, stride=2, ceil_mode=True) + 1x1 conv ----
    # TODO(synk): ceil_mode=True partial windows (odd H/W, count_include_pad=False)
    # and the dilation>1 AvgPool2dSame path need per-window tap counts; only the
    # even-H/W, stride=2, dilation=1 path is implemented.
    assert stride == 2 and dilation == 1 and H % 2 == 0 and W % 2 == 0, (
        "only the stride=2, dilation=1, even-H/W Downsample path is supported")

    Ho, Wo = H // 2, W // 2
    # Zero-copy view: both input rows of every output row sit side by side on
    # the lane axis -> the kernel reads the NCHW input directly (one HBM pass).
    xv = x_nchw.reshape(N, Cin, Ho, 2 * W)

    # Fold the 1/4 average into the conv weight; match the activation dtype so
    # bf16 activations stay on the fast MXU path (bias stays f32).
    w_fold = (w_mat * 0.25).astype(compute_dtype)

    # 0/1 selector summing the four taps of each output column.
    j = jnp.arange(2 * W, dtype=jnp.int32)[:, None]
    k = jnp.arange(Wo, dtype=jnp.int32)[None, :]
    sel = ((j == 2 * k) | (j == 2 * k + 1) |
           (j == W + 2 * k) | (j == W + 2 * k + 1))
    s2 = sel.astype(compute_dtype)                               # (2W, Wo)

    tho = _choose_row_tile(Ho, Wo, Cin, Cout, W, in_itemsize,
                           jnp.dtype(compute_dtype).itemsize, budget, N)
    n_h = pl.cdiv(Ho, tho)
    tp = tho * Wo
    p_pad = n_h * tp

    out = pl.pallas_call(
        partial(_pool_conv_kernel, tho=tho, wo=Wo),
        out_shape=jax.ShapeDtypeStruct((N, Cout, p_pad), compute_dtype),
        grid_spec=pltpu.PrefetchScalarGridSpec(
            num_scalar_prefetch=0,
            grid=(N, n_h),
            in_specs=[
                pl.BlockSpec((None, Cin, tho, 2 * W), lambda n, h: (n, 0, h, 0)),
                pl.BlockSpec((2 * W, Wo), lambda n, h: (0, 0)),
                pl.BlockSpec((Cout, Cin), lambda n, h: (0, 0)),
                pl.BlockSpec((Cout, 1), lambda n, h: (0, 0)),
            ],
            out_specs=pl.BlockSpec((None, Cout, tp), lambda n, h: (n, 0, h)),
            scratch_shapes=[pltpu.VMEM((Cin, tp), compute_dtype)],
        ),
        compiler_params=pltpu.CompilerParams(
            dimension_semantics=("parallel", "parallel"),
            vmem_limit_bytes=budget),
    )(xv, s2, w_fold, b2)

    # (N, Cout, Ho_pad*Wo) reshapes straight to NCHW; the trim is only needed
    # when Ho isn't a multiple of the row tile (small output-only copy).
    out = out.reshape(N, Cout, n_h * tho, Wo)
    if n_h * tho != Ho:
        out = out[:, :, :Ho, :]
    return out


def _reference(x_nchw, w_oihw, bias):
    """Pure-JAX reference: 2x2/stride-2 avg pool + 1x1 conv (NCHW)."""
    N, Cin, H, W = x_nchw.shape
    Cout = w_oihw.shape[0]
    xp = x_nchw.reshape(N, Cin, H // 2, 2, W // 2, 2).mean(axis=(3, 5))
    w = w_oihw.reshape(Cout, Cin)
    return jnp.einsum("nchw,oc->nohw", xp, w) + bias.reshape(1, Cout, 1, 1)


if __name__ == "__main__":
    # Module config: Downsample(in_chs=4, out_chs=8, stride=2, dilation=1)
    in_chs, out_chs, stride, dilation = 4, 8, 2, 1
    N, H, W = 2, 16, 16

    key = jax.random.PRNGKey(0)
    kx, kw, kb = jax.random.split(key, 3)
    x = jax.random.normal(kx, (N, in_chs, H, W), dtype=jnp.float32)
    w = jax.random.normal(kw, (out_chs, in_chs, 1, 1), dtype=jnp.float32) * 0.1
    b = jax.random.normal(kb, (out_chs,), dtype=jnp.float32) * 0.1

    out = downsample(x, w, b, stride=stride, dilation=dilation)
    out = jax.block_until_ready(out)

    ref = _reference(x, w, b)
    assert out.shape == (N, out_chs, H // 2, W // 2), out.shape
    err = float(jnp.max(jnp.abs(out - ref)))
    assert jnp.allclose(out, ref, atol=1e-5, rtol=1e-5), err
    print("KERNEL_OK")
</pallas_src>

<mosaic_0001>
module attributes {stable_mosaic.version = 11 : i64} {
  func.func @_pool_conv_kernel(%arg0: i32, %arg1: i32, %arg2: memref<1x4x8x32xf32, #tpu.memory_space<vmem>>, %arg3: memref<32x8xf32, #tpu.memory_space<vmem>>, %arg4: memref<8x4xf32, #tpu.memory_space<vmem>>, %arg5: memref<8x1xf32, #tpu.memory_space<vmem>>, %arg6: memref<1x8x64xf32, #tpu.memory_space<vmem>>, %arg7: memref<4x64xf32, #tpu.memory_space<vmem>>) attributes {dimension_semantics = [#tpu.dimension_semantics<parallel>, #tpu.dimension_semantics<parallel>], iteration_bounds = array<i64: 2, 1>, scalar_prefetch = 0 : i64, scratch_operands = 1 : i64, tpu.core_type = #tpu.core_type<tc>, window_params = [{transform_indices = @transform_0, window_bounds = array<i64: 1, 4, 8, 32>}, {pipeline_mode = #tpu.pipeline_mode<synchronous>, transform_indices = @transform_1, window_bounds = array<i64: 32, 8>}, {pipeline_mode = #tpu.pipeline_mode<synchronous>, transform_indices = @transform_2, window_bounds = array<i64: 8, 4>}, {pipeline_mode = #tpu.pipeline_mode<synchronous>, transform_indices = @transform_3, window_bounds = array<i64: 8, 1>}, {transform_indices = @transform_4, window_bounds = array<i64: 1, 8, 64>}]} {
    %c0 = arith.constant 0 : index
    %c0_0 = arith.constant 0 : index
    %c0_1 = arith.constant 0 : index
    %c0_2 = arith.constant 0 : index
    %0 = vector.load %arg2[%c0, %c0_0, %c0_1, %c0_2] : memref<1x4x8x32xf32, #tpu.memory_space<vmem>>, vector<1x4x8x32xf32>
    %1 = vector.shape_cast %0 : vector<1x4x8x32xf32> to vector<4x8x32xf32>
    %2 = vector.shape_cast %1 : vector<4x8x32xf32> to vector<32x32xf32>
    %c0_3 = arith.constant 0 : index
    %c0_4 = arith.constant 0 : index
    %3 = vector.load %arg3[%c0_3, %c0_4] : memref<32x8xf32, #tpu.memory_space<vmem>>, vector<32x8xf32>
    %cst = arith.constant dense<0.000000e+00> : vector<32x8xf32>
    %4 = tpu.matmul %2, %3, %cst {dimension_numbers = #tpu.dot_dimension_numbers<[1], [0], [0], [1], [0, 0, 1, 1], [], []>} : vector<32x32xf32>, vector<32x8xf32>, vector<32x8xf32> -> vector<32x8xf32>
    %5 = vector.shape_cast %4 : vector<32x8xf32> to vector<4x8x8xf32>
    %6 = vector.extract_strided_slice %5 {offsets = [0, 0, 0], sizes = [4, 1, 8], strides = [1, 1, 1]} : vector<4x8x8xf32> to vector<4x1x8xf32>
    %7 = vector.shape_cast %6 : vector<4x1x8xf32> to vector<4x8xf32>
    %c0_5 = arith.constant 0 : index
    %c0_6 = arith.constant 0 : index
    %8 = vector.load %arg7[%c0_5, %c0_6] : memref<4x64xf32, #tpu.memory_space<vmem>>, vector<4x8xf32>
    tpu.vector_store %arg7[%c0_5, %c0_6], %7 {strides = array<i32>} : memref<4x64xf32, #tpu.memory_space<vmem>>, vector<4x8xf32>,
    %9 = vector.extract_strided_slice %5 {offsets = [0, 1, 0], sizes = [4, 1, 8], strides = [1, 1, 1]} : vector<4x8x8xf32> to vector<4x1x8xf32>
    %10 = vector.shape_cast %9 : vector<4x1x8xf32> to vector<4x8xf32>
    %c0_7 = arith.constant 0 : index
    %c8 = arith.constant 8 : index
    %11 = vector.load %arg7[%c0_7, %c8] : memref<4x64xf32, #tpu.memory_space<vmem>>, vector<4x8xf32>
    tpu.vector_store %arg7[%c0_7, %c8], %10 {strides = array<i32>} : memref<4x64xf32, #tpu.memory_space<vmem>>, vector<4x8xf32>,
    %12 = vector.extract_strided_slice %5 {offsets = [0, 2, 0], sizes = [4, 1, 8], strides = [1, 1, 1]} : vector<4x8x8xf32> to vector<4x1x8xf32>
    %13 = vector.shape_cast %12 : vector<4x1x8xf32> to vector<4x8xf32>
    %c0_8 = arith.constant 0 : index
    %c16 = arith.constant 16 : index
    %14 = vector.load %arg7[%c0_8, %c16] : memref<4x64xf32, #tpu.memory_space<vmem>>, vector<4x8xf32>
    tpu.vector_store %arg7[%c0_8, %c16], %13 {strides = array<i32>} : memref<4x64xf32, #tpu.memory_space<vmem>>, vector<4x8xf32>,
    %15 = vector.extract_strided_slice %5 {offsets = [0, 3, 0], sizes = [4, 1, 8], strides = [1, 1, 1]} : vector<4x8x8xf32> to vector<4x1x8xf32>
    %16 = vector.shape_cast %15 : vector<4x1x8xf32> to vector<4x8xf32>
    %c0_9 = arith.constant 0 : index
    %c24 = arith.constant 24 : index
    %17 = vector.load %arg7[%c0_9, %c24] : memref<4x64xf32, #tpu.memory_space<vmem>>, vector<4x8xf32>
    tpu.vector_store %arg7[%c0_9, %c24], %16 {strides = array<i32>} : memref<4x64xf32, #tpu.memory_space<vmem>>, vector<4x8xf32>,
    %18 = vector.extract_strided_slice %5 {offsets = [0, 4, 0], sizes = [4, 1, 8], strides = [1, 1, 1]} : vector<4x8x8xf32> to vector<4x1x8xf32>
    %19 = vector.shape_cast %18 : vector<4x1x8xf32> to vector<4x8xf32>
    %c0_10 = arith.constant 0 : index
    %c32 = arith.constant 32 : index
    %20 = vector.load %arg7[%c0_10, %c32] : memref<4x64xf32, #tpu.memory_space<vmem>>, vector<4x8xf32>
    tpu.vector_store %arg7[%c0_10, %c32], %19 {strides = array<i32>} : memref<4x64xf32, #tpu.memory_space<vmem>>, vector<4x8xf32>,
    %21 = vector.extract_strided_slice %5 {offsets = [0, 5, 0], sizes = [4, 1, 8], strides = [1, 1, 1]} : vector<4x8x8xf32> to vector<4x1x8xf32>
    %22 = vector.shape_cast %21 : vector<4x1x8xf32> to vector<4x8xf32>
    %c0_11 = arith.constant 0 : index
    %c40 = arith.constant 40 : index
    %23 = vector.load %arg7[%c0_11, %c40] : memref<4x64xf32, #tpu.memory_space<vmem>>, vector<4x8xf32>
    tpu.vector_store %arg7[%c0_11, %c40], %22 {strides = array<i32>} : memref<4x64xf32, #tpu.memory_space<vmem>>, vector<4x8xf32>,
    %24 = vector.extract_strided_slice %5 {offsets = [0, 6, 0], sizes = [4, 1, 8], strides = [1, 1, 1]} : vector<4x8x8xf32> to vector<4x1x8xf32>
    %25 = vector.shape_cast %24 : vector<4x1x8xf32> to vector<4x8xf32>
    %c0_12 = arith.constant 0 : index
    %c48 = arith.constant 48 : index
    %26 = vector.load %arg7[%c0_12, %c48] : memref<4x64xf32, #tpu.memory_space<vmem>>, vector<4x8xf32>
    tpu.vector_store %arg7[%c0_12, %c48], %25 {strides = array<i32>} : memref<4x64xf32, #tpu.memory_space<vmem>>, vector<4x8xf32>,
    %27 = vector.extract_strided_slice %5 {offsets = [0, 7, 0], sizes = [4, 1, 8], strides = [1, 1, 1]} : vector<4x8x8xf32> to vector<4x1x8xf32>
    %28 = vector.shape_cast %27 : vector<4x1x8xf32> to vector<4x8xf32>
    %c0_13 = arith.constant 0 : index
    %c56 = arith.constant 56 : index
    %29 = vector.load %arg7[%c0_13, %c56] : memref<4x64xf32, #tpu.memory_space<vmem>>, vector<4x8xf32>
    tpu.vector_store %arg7[%c0_13, %c56], %28 {strides = array<i32>} : memref<4x64xf32, #tpu.memory_space<vmem>>, vector<4x8xf32>,
    %c0_14 = arith.constant 0 : index
    %c0_15 = arith.constant 0 : index
    %30 = vector.load %arg4[%c0_14, %c0_15] : memref<8x4xf32, #tpu.memory_space<vmem>>, vector<8x4xf32>
    %c0_16 = arith.constant 0 : index
    %c0_17 = arith.constant 0 : index
    %31 = vector.load %arg7[%c0_16, %c0_17] : memref<4x64xf32, #tpu.memory_space<vmem>>, vector<4x64xf32>
    %cst_18 = arith.constant dense<0.000000e+00> : vector<8x64xf32>
    %32 = tpu.matmul %30, %31, %cst_18 {dimension_numbers = #tpu.dot_dimension_numbers<[1], [0], [0], [1], [0, 0, 1, 1], [], []>} : vector<8x4xf32>, vector<4x64xf32>, vector<8x64xf32> -> vector<8x64xf32>
    %c0_19 = arith.constant 0 : index
    %c0_20 = arith.constant 0 : index
    %33 = vector.load %arg5[%c0_19, %c0_20] : memref<8x1xf32, #tpu.memory_space<vmem>>, vector<8x1xf32>
    %34 = vector.broadcast %33 : vector<8x1xf32> to vector<8x64xf32>
    %35 = arith.addf %32, %34 : vector<8x64xf32>
    %c0_21 = arith.constant 0 : index
    %c0_22 = arith.constant 0 : index
    %c0_23 = arith.constant 0 : index
    %36 = vector.load %arg6[%c0_21, %c0_22, %c0_23] : memref<1x8x64xf32, #tpu.memory_space<vmem>>, vector<1x8x64xf32>
    %37 = vector.shape_cast %36 : vector<1x8x64xf32> to vector<8x64xf32>
    %38 = vector.shape_cast %35 : vector<8x64xf32> to vector<1x8x64xf32>
    tpu.vector_store %arg6[%c0_21, %c0_22, %c0_23], %38 {strides = array<i32>} : memref<1x8x64xf32, #tpu.memory_space<vmem>>, vector<1x8x64xf32>,
    return
  }
  func.func @transform_0(%arg0: i32, %arg1: i32) -> (i32, i32, i32, i32) {
    %c0_i32 = arith.constant 0 : i32
    %c0_i32_0 = arith.constant 0 : i32
    %c0_i32_1 = arith.constant 0 : i32
    return %arg0, %c0_i32, %arg1, %c0_i32_0 : i32, i32, i32, i32
  }
  func.func @transform_1(%arg0: i32, %arg1: i32) -> (i32, i32) {
    %c0_i32 = arith.constant 0 : i32
    %c0_i32_0 = arith.constant 0 : i32
    %c0_i32_1 = arith.constant 0 : i32
    return %c0_i32, %c0_i32_0 : i32, i32
  }
  func.func @transform_2(%arg0: i32, %arg1: i32) -> (i32, i32) {
    %c0_i32 = arith.constant 0 : i32
    %c0_i32_0 = arith.constant 0 : i32
    %c0_i32_1 = arith.constant 0 : i32
    return %c0_i32, %c0_i32_0 : i32, i32
  }
  func.func @transform_3(%arg0: i32, %arg1: i32) -> (i32, i32) {
    %c0_i32 = arith.constant 0 : i32
    %c0_i32_0 = arith.constant 0 : i32
    %c0_i32_1 = arith.constant 0 : i32
    return %c0_i32, %c0_i32_0 : i32, i32
  }
  func.func @transform_4(%arg0: i32, %arg1: i32) -> (i32, i32, i32) {
    %c0_i32 = arith.constant 0 : i32
    %c0_i32_0 = arith.constant 0 : i32
    return %arg0, %c0_i32, %arg1 : i32, i32, i32
  }
}

</mosaic_0001>

<llo_original>
// kernel: downsample.1
$region0: #{downsample.1}
  #allocation0 [shape = 'u32[]', space=smem, size = 0x4, offset = 0x4, fixed_abs, tag = 'smem constant byte address 0x4 - core index']
  #allocation1 [shape = 'u32[144,128]{1,0:T(1,128)}', space=vmem, size = 0x12000, scoped, tag = 'internal scratch']
  #allocation2 [shape = 'f32[4,64]{1,0:T(4,128)}', space=vmem, size = 0x800, scoped, tag = 'scratch operand']
  %s0 = inlined_call_operand.vmem [shape: f32[2,4,8,32], index: 0, kind: input, shape index: {}]
  %s1 = inlined_call_operand.vmem [shape: f32[32,8], index: 1, kind: input, shape index: {}]
  %s2 = inlined_call_operand.vmem [shape: f32[8,4], index: 2, kind: input, shape index: {}]
  %s3 = inlined_call_operand.vmem [shape: f32[8,1], index: 3, kind: input, shape index: {}]
  %s4 = inlined_call_operand.vmem [shape: f32[2,8,64], index: 4, kind: output, shape index: {}]
  %s5 = sld [smem:[#allocation0]]
  $region49: #{downsample.1} parent=0
    _
  %s7 = ssub.s32 1, %s5
  %s8 = scalar_select 0, %s7, %s5
  loop: start=0, step=1, limit=4
  $region2: #{downsample.1} parent=0 // loop_pre_header
    _
  $region3: #{downsample.1} parent=0 // loop_header
    %s10 = sphi 0, %s14
    %p11 = scmp.ge.s32.totalorder %s10, 4
    %s17 = sphi 0, %s29
    %s18 = sphi 0, %s25
    %s19 = sphi 0, %s17
    %s20 = sphi 0, %s18
    %s21 = sphi 0, %s19
    %s22 = sphi 0, %s20
    %s34 = sphi 0, %s36
    %s37 = sphi 0, %s34
    %s38 = sphi 0, %s37
    %s54 = sphi 0, %s38
    %s58 = sphi 0, %s58
    %s60 = sphi 0, %s58
    %s61 = sphi 0, %s60
    %s75 = sphi 0, %s61
    %s79 = sphi 0, %s79
    %s81 = sphi 0, %s79
    %s82 = sphi 0, %s81
    %s96 = sphi 0, %s82
    %s100 = sphi 0, %s100
    %s102 = sphi 0, %s100
    %s103 = sphi 0, %s102
    %s117 = sphi 0, %s103
    %s125 = sphi 0, %s127
    %s128 = sphi 0, %s125
    %s129 = sphi 0, %s128
    %s145 = sphi 0, %s129
  $region4: #{downsample.1} parent=0 // loop_header_branch
    %13 = sbr.rel (%p11) target = $region8
  $region5: #{downsample.1} parent=0 // loop_body
    %s15 = ssub.s32 %s10, 1
    %s16 = ssub.s32 %s10, 2
    %s23 = sadd.s32 1, %s18
    %p24 = scmp.ge.s32.totalorder %s23, 1
    %s25 = scalar_select %p24, 0, %s23
    %s26 = sadd.s32 1, %s17
    %s27 = scalar_select %p24, %s26, %s17
    %p28 = scmp.ge.s32.totalorder %s27, 2
    %s29 = scalar_select %p28, 0, %s27
    %s30 = ssub.s32 %s17, %s29
    %s31 = ssub.s32 %s18, %s25
    %s32 = sor.u32 %s30, %s31
    %p33 = scmp.eq.s32.totalorder %s32, 0
    %s35 = sadd.s32 %s34, 1
    %s36 = scalar_select %p33, %s34, %s35
    %p39 = pneg %p33
    %p40 = scmp.eq.s32.totalorder %s10, 1
    %p41 = por %p39, %p40
    %p42 = scmp.ne.s32.totalorder %s34, %s37
    %p43 = scmp.eq.s32.totalorder %s10, 0
    %p44 = por %p42, %p43
    %p45 = scmp.ne.s32.totalorder %s34, %s37
    %p46 = scmp.eq.s32.totalorder %s15, 1
    %p47 = por %p45, %p46
    %p48 = scmp.ne.s32.totalorder %s37, %s38
    %p49 = scmp.eq.s32.totalorder %s15, 0
    %p50 = por %p48, %p49
    %p51 = scmp.ne.s32.totalorder %s37, %s38
    %p52 = scmp.eq.s32.totalorder %s16, 1
    %p53 = por %p51, %p52
    %p55 = scmp.ne.s32.totalorder %s38, %s54
    %p56 = scmp.eq.s32.totalorder %s16, 0
    %p57 = por %p55, %p56
    %s59 = sadd.s32 %s58, 1
    %p62 = scmp.eq.s32.totalorder %s10, 1
    %p63 = scmp.ne.s32.totalorder %s58, %s60
    %p64 = scmp.eq.s32.totalorder %s10, 0
    %p65 = por %p63, %p64
    %p66 = scmp.ne.s32.totalorder %s58, %s60
    %p67 = scmp.eq.s32.totalorder %s15, 1
    %p68 = por %p66, %p67
    %p69 = scmp.ne.s32.totalorder %s60, %s61
    %p70 = scmp.eq.s32.totalorder %s15, 0
    %p71 = por %p69, %p70
    %p72 = scmp.ne.s32.totalorder %s60, %s61
    %p73 = scmp.eq.s32.totalorder %s16, 1
    %p74 = por %p72, %p73
    %p76 = scmp.ne.s32.totalorder %s61, %s75
    %p77 = scmp.eq.s32.totalorder %s16, 0
    %p78 = por %p76, %p77
    %s80 = sadd.s32 %s79, 1
    %p83 = scmp.eq.s32.totalorder %s10, 1
    %p84 = scmp.ne.s32.totalorder %s79, %s81
    %p85 = scmp.eq.s32.totalorder %s10, 0
    %p86 = por %p84, %p85
    %p87 = scmp.ne.s32.totalorder %s79, %s81
    %p88 = scmp.eq.s32.totalorder %s15, 1
    %p89 = por %p87, %p88
    %p90 = scmp.ne.s32.totalorder %s81, %s82
    %p91 = scmp.eq.s32.totalorder %s15, 0
    %p92 = por %p90, %p91
    %p93 = scmp.ne.s32.totalorder %s81, %s82
    %p94 = scmp.eq.s32.totalorder %s16, 1
    %p95 = por %p93, %p94
    %p97 = scmp.ne.s32.totalorder %s82, %s96
    %p98 = scmp.eq.s32.totalorder %s16, 0
    %p99 = por %p97, %p98
    %s101 = sadd.s32 %s100, 1
    %p104 = scmp.eq.s32.totalorder %s10, 1
    %p105 = scmp.ne.s32.totalorder %s100, %s102
    %p106 = scmp.eq.s32.totalorder %s10, 0
    %p107 = por %p105, %p106
    %p108 = scmp.ne.s32.totalorder %s100, %s102
    %p109 = scmp.eq.s32.totalorder %s15, 1
    %p110 = por %p108, %p109
    %p111 = scmp.ne.s32.totalorder %s102, %s103
    %p112 = scmp.eq.s32.totalorder %s15, 0
    %p113 = por %p111, %p112
    %p114 = scmp.ne.s32.totalorder %s102, %s103
    %p115 = scmp.eq.s32.totalorder %s16, 1
    %p116 = por %p114, %p115
    %p118 = scmp.ne.s32.totalorder %s103, %s117
    %p119 = scmp.eq.s32.totalorder %s16, 0
    %p120 = por %p118, %p119
    %s121 = ssub.s32 %s17, %s29
    %s122 = ssub.s32 %s18, %s25
    %s123 = sor.u32 %s121, %s122
    %p124 = scmp.eq.s32.totalorder %s123, 0
    %s126 = sadd.s32 %s125, 1
    %s127 = scalar_select %p124, %s125, %s126
    %p130 = pneg %p124
    %p131 = scmp.eq.s32.totalorder %s10, 1
    %p132 = por %p130, %p131
    %p133 = scmp.ne.s32.totalorder %s125, %s128
    %p134 = scmp.eq.s32.totalorder %s10, 0
    %p135 = por %p133, %p134
    %p136 = scmp.ne.s32.totalorder %s125, %s128
    %p137 = scmp.eq.s32.totalorder %s15, 1
    %p138 = por %p136, %p137
    %p139 = scmp.ne.s32.totalorder %s128, %s129
    %p140 = scmp.eq.s32.totalorder %s15, 0
    %p141 = por %p139, %p140
    %p142 = scmp.ne.s32.totalorder %s128, %s129
    %p143 = scmp.eq.s32.totalorder %s16, 1
    %p144 = por %p142, %p143
    %p146 = scmp.ne.s32.totalorder %s129, %s145
    %p147 = scmp.eq.s32.totalorder %s16, 0
    %p148 = por %p146, %p147
    %p149 = scmp.le.s32.totalorder 1, %s10
    %p150 = scmp.lt.s32.totalorder %s10, 3
    %p151 = pnand %p149, %p150
    %p152 = pneg %p151
    // Predicated region
    $region9: #{downsample.1} parent=5 // pred_check
      _
    $region10: #{downsample.1} parent=5 // pred_check_branch
      %154 = sbr.rel (%p151) target = $region12
    $region11: #{downsample.1} parent=5 // pred_region
      %s155 = ssub.s32 %s10, 1
      // Predicated region
      $region13: #{downsample.1} parent=11 // pred_check
        %p156 = pneg %p71
      $region14: #{downsample.1} parent=11 // pred_check_branch
        %158 = sbr.rel (%p156) target = $region16
      $region15: #{downsample.1} parent=11 // pred_region
        _
      $region16: #{downsample.1} parent=11 // pred_fallthru
        _
      // Predicated region
      $region17: #{downsample.1} parent=11 // pred_check
        %p159 = pneg %p92
      $region18: #{downsample.1} parent=11 // pred_check_branch
        %161 = sbr.rel (%p159) target = $region20
      $region19: #{downsample.1} parent=11 // pred_region
        _
      $region20: #{downsample.1} parent=11 // pred_fallthru
        _
      // Predicated region
      $region21: #{downsample.1} parent=11 // pred_check
        %p162 = pneg %p113
      $region22: #{downsample.1} parent=11 // pred_check_branch
        %164 = sbr.rel (%p162) target = $region24
      $region23: #{downsample.1} parent=11 // pred_region
        _
      $region24: #{downsample.1} parent=11 // pred_fallthru
        _
    $region12: #{downsample.1} parent=5 // pred_fallthru
      _
    %p165 = scmp.lt.s32.totalorder %s10, 2
    // Predicated region
    $region25: #{downsample.1} parent=5 // pred_check
      %p166 = pneg %p165
    $region26: #{downsample.1} parent=5 // pred_check_branch
      %168 = sbr.rel (%p166) target = $region28
    $region27: #{downsample.1} parent=5 // pred_region
      // Predicated region
      $region29: #{downsample.1} parent=27 // pred_check
        %p169 = pneg %p44
      $region30: #{downsample.1} parent=27 // pred_check_branch
        %171 = sbr.rel (%p169) target = $region32
      $region31: #{downsample.1} parent=27 // pred_region
        %p172 = scmp.lt.s32.totalorder %s17, 1
        %s173 = scalar_select %p172, %s17, 1
        %p174 = scmp.lt.s32.totalorder %s18, 0
        %s175 = scalar_select %p174, %s18, 0
        %s176 = smul.addr %s173, 4
        %s177 = sadd.s32 %s175, %s176
        %s178 = smul.addr %s177, 8
        %s179 = scalar_lea.vmem %s0, %s178
      $region32: #{downsample.1} parent=27 // pred_fallthru
        _
    $region28: #{downsample.1} parent=5 // pred_fallthru
      _
    %p180 = scmp.le.s32.totalorder 1, %s10
    %p181 = scmp.lt.s32.totalorder %s10, 3
    %p182 = pnand %p180, %p181
    %p183 = pneg %p182
    // Predicated region
    $region33: #{downsample.1} parent=5 // pred_check
      _
    $region34: #{downsample.1} parent=5 // pred_check_branch
      %185 = sbr.rel (%p182) target = $region36
    $region35: #{downsample.1} parent=5 // pred_region
      %s186 = ssub.s32 %s10, 1
      %p187 = scmp.lt.s32.totalorder %s19, 1
      %s188 = scalar_select %p187, %s19, 1
      %p189 = scmp.lt.s32.totalorder %s20, 0
      %s190 = scalar_select %p189, %s20, 0
      %s191 = smul.addr %s188, 4
      %s192 = sadd.s32 %s190, %s191
      %s193 = smul.addr %s192, 8
      %s194 = scalar_lea.vmem %s0, %s193
      %p195 = pneg %p50
      %p196 = pneg %p47
      %p197 = pneg %p71
      %p198 = pneg %p68
      %p199 = pneg %p92
      %p200 = pneg %p89
      %p201 = pneg %p113
      %p202 = pneg %p110
      %p203 = pneg %p141
      %p204 = pneg %p138
      %p205 = scmp.lt.s32.totalorder %s19, 1
      %s206 = scalar_select %p205, %s19, 1
      %p207 = scmp.lt.s32.totalorder %s20, 0
      %s208 = scalar_select %p207, %s20, 0
      %s209 = sadd.s32 %s208, %s206
      %s210 = smul.addr %s209, 8
      %s211 = scalar_lea.vmem %s4, %s210
      %p212 = scmp.lt.s32.totalorder %s19, 1
      %s213 = scalar_select %p212, %s19, 1
      %p214 = scmp.lt.s32.totalorder %s20, 0
      %s215 = scalar_select %p214, %s20, 0
      %s216 = smul.addr %s213, 4
      %s217 = sadd.s32 %s215, %s216
      %s218 = smul.addr %s217, 8
      %s219 = scalar_lea.vmem %s0, %s218
      %p220 = scmp.lt.s32.totalorder %s19, 1
      %s221 = scalar_select %p220, %s19, 1
      %p222 = scmp.lt.s32.totalorder %s20, 0
      %s223 = scalar_select %p222, %s20, 0
      %s224 = sadd.s32 %s223, %s221
      %s225 = smul.addr %s224, 8
      %s226 = scalar_lea.vmem %s4, %s225
      %v227 = vld [vmem:[%s219] sm:$0xff]
      %v228 = vld [vmem:[%s219 + $0x8] sm:$0xff]
      %v229 = vld [vmem:[%s219 + $0x10] sm:$0xff]
      %v230 = vld [vmem:[%s219 + $0x18] sm:$0xff]
      %v231 = vld [vmem:[%s1] sm:$0xff]
      %v232 = vld [vmem:[%s1 + $0x8] sm:$0xff]
      %v233 = vld [vmem:[%s1 + $0x10] sm:$0xff]
      %v234 = vld [vmem:[%s1 + $0x18] sm:$0xff]
      %vm235 = vcmask 261120
      %v237 = vsel %vm235, %v227, 0
      %v240 = vsel %vm235, %v228, 0
      %v243 = vsel %vm235, %v229, 0
      %v246 = vsel %vm235, %v230, 0
      %248 = vmatprep.subr.mxu0 0.0
      %249 = vmatpush1.msra.mxu0 0.0
      %250 = vmatprep.subr.mxu0 0.0
      %251 = vmatpush1.msra.mxu0 0.0
      %252 = vmatprep.subr.mxu0 0.0
      %253 = vmatpush1.msra.mxu0 0.0
      %254 = vmatprep.subr.mxu0 0.0
      %255 = vmatpush1.msra.mxu0 0.0
      %256 = vmatprep.subr.mxu0 0.0
      %257 = vmatpush1.msra.mxu0 0.0
      %258 = vmatprep.subr.mxu0 0.0
      %259 = vmatpush1.msra.mxu0 0.0
      %260 = vmatprep.subr.mxu0 0.0
      %261 = vmatpush1.msra.mxu0 0.0
      %262 = vmatprep.subr.mxu0 0.0
      %263 = vmatpush1.msra.mxu0 0.0
      %264 = vmatprep.subr.mxu0 0.0
      %265 = vmatpush1.msra.mxu0 0.0
      %266 = vmatprep.subr.mxu0 0.0
      %267 = vmatpush1.msra.mxu0 0.0
      %268 = vmatprep.subr.mxu0 0.0
      %269 = vmatpush1.msra.mxu0 0.0
      %270 = vmatprep.subr.mxu0 0.0
      %271 = vmatpush1.msra.mxu0 0.0
      %272 = vmatprep.subr.mxu0 0.0
      %273 = vmatpush1.msra.mxu0 %v234
      %274 = vmatprep.subr.mxu0 0.0
      %275 = vmatpush1.msra.mxu0 %v233
      %276 = vmatprep.subr.mxu0 0.0
      %277 = vmatpush1.msra.mxu0 %v232
      %278 = vmatprep.subr.mxu0 0.0
      %279 = vmatpush1.msra.mxu0 %v231
      %280 = vmatprep.subr.mxu0 0.0
      %281 = vmatpush2.msra.mxu0 0.0
      %282 = vmatprep.subr.mxu0 0.0
      %283 = vmatpush2.msra.mxu0 0.0
      %284 = vmatprep.subr.mxu0 0.0
      %285 = vmatpush2.msra.mxu0 0.0
      %286 = vmatprep.subr.mxu0 0.0
      %287 = vmatpush2.msra.mxu0 0.0
      %288 = vmatprep.subr.mxu0 0.0
      %289 = vmatpush2.msra.mxu0 0.0
      %290 = vmatprep.subr.mxu0 0.0
      %291 = vmatpush2.msra.mxu0 0.0
      %292 = vmatprep.subr.mxu0 0.0
      %293 = vmatpush2.msra.mxu0 0.0
      %294 = vmatprep.subr.mxu0 0.0
      %295 = vmatpush2.msra.mxu0 0.0
      %296 = vmatprep.subr.mxu0 0.0
      %297 = vmatpush2.msra.mxu0 0.0
      %298 = vmatprep.subr.mxu0 0.0
      %299 = vmatpush2.msra.mxu0 0.0
      %300 = vmatprep.subr.mxu0 0.0
      %301 = vmatpush2.msra.mxu0 0.0
      %302 = vmatprep.subr.mxu0 0.0
      %303 = vmatpush2.msra.mxu0 0.0
      %304 = vmatprep.subr.mxu0 0.0
      %305 = vmatpush2.msra.mxu0 0.0
      %306 = vmatprep.subr.mxu0 0.0
      %307 = vmatpush2.msra.mxu0 0.0
      %308 = vmatprep.subr.mxu0 0.0
      %309 = vmatpush2.msra.mxu0 0.0
      %310 = vmatprep.subr.mxu0 0.0
      %311 = vmatpush2.msra.mxu0 0.0
      %312 = vmatprep.mubr.f32.mxu0 0.0
      %313 = vmatmul.mubr.f32.gmra.mxu0 %v237
      %v314 = vpop.f32.mrf.mxu0
      %v315 = vadd.f32 0.0, %v314
      %v316 = vpop.f32.mrf.mxu0
      %317 = vmatprep.mubr.f32.mxu0 0.0
      %318 = vmatmul.mubr.f32.gmra.mxu0 %v240
      %v319 = vpop.f32.mrf.mxu0
      %v320 = vadd.f32 0.0, %v319
      %v321 = vpop.f32.mrf.mxu0
      %322 = vmatprep.mubr.f32.mxu0 0.0
      %323 = vmatmul.mubr.f32.gmra.mxu0 %v243
      %v324 = vpop.f32.mrf.mxu0
      %v325 = vadd.f32 0.0, %v324
      %v326 = vpop.f32.mrf.mxu0
      %327 = vmatprep.mubr.f32.mxu0 0.0
      %328 = vmatmul.mubr.f32.gmra.mxu0 %v246
      %v329 = vpop.f32.mrf.mxu0
      %v330 = vadd.f32 0.0, %v329
      %v331 = vpop.f32.mrf.mxu0
      %332 = vdwg.mxu0
      %v337 = vrot.slane %v320, 7
      %vm338 = vcmask 1041409
      %v339 = vsel %vm338, %v337, %v315
      %v340 = vrot.slane %v325, 6
      %vm341 = vcmask 1042434
      %v342 = vsel %vm341, %v340, %v339
      %v343 = vrot.slane %v330, 5
      %vm344 = vcmask 1043459
      %v345 = vsel %vm344, %v343, %v342
      %vm347 = vcmask 60416
      %348 = vst.msk [vmem:[#allocation2] sm:$0xf] %vm347, %v345
      %v349 = vsel %vm341, %v337, %v315
      %v350 = vsel %vm344, %v340, %v349
      %vm351 = vcmask 1044484
      %v352 = vsel %vm351, %v343, %v350
      %353 = vrot.lane.b32.xlu0 %v352, 8
      %v354 = vpop.permute.xlu0 %353
      %vm356 = vcmask 127041
      %357 = vst.msk [vmem:[#allocation2 - $0x1] sm:$0x1e] %vm356, %v354
      %v358 = vsel %vm344, %v337, %v315
      %v359 = vsel %vm351, %v340, %v358
      %vm360 = vcmask 1045509
      %v361 = vsel %vm360, %v343, %v359
      %362 = vrot.lane.b32.xlu0 %v361, 16
      %v363 = vpop.permute.xlu0 %362
      %vm365 = vcmask 193666
      %366 = vst.msk [vmem:[#allocation2 - $0x2] sm:$0x3c] %vm365, %v363
      %v367 = vsel %vm351, %v337, %v315
      %v368 = vsel %vm360, %v340, %v367
      %vm369 = vcmask 1046534
      %v370 = vsel %vm369, %v343, %v368
      %371 = vrot.lane.b32.xlu0 %v370, 24
      %v372 = vpop.permute.xlu0 %371
      %vm374 = vcmask 260291
      %375 = vst.msk [vmem:[#allocation2 - $0x3] sm:$0x78] %vm374, %v372
      %v376 = vsel %vm360, %v337, %v315
      %v377 = vsel %vm369, %v340, %v376
      %vm378 = vcmask 1047559
      %v379 = vsel %vm378, %v343, %v377
      %380 = vrot.lane.b32.xlu0 %v379, 32
      %v381 = vpop.permute.xlu0 %380
      %vm383 = vcmask 326916
      %384 = vst.msk [vmem:[#allocation2 - $0x4] sm:$0xf0] %vm383, %v381
      %v385 = vsel %vm369, %v337, %v315
      %v386 = vsel %vm378, %v340, %v385
      %387 = vrot.lane.b32.xlu0 %v386, 40
      %v388 = vpop.permute.xlu0 %387
      %389 = vrot.lane.b32.xlu0 %v343, 40
      %v390 = vpop.permute.xlu0 %389
      %vm393 = vcmask 392517
      %394 = vst.msk [vmem:[#allocation2 - $0x5] sm:$0xe0] %vm393, %v388
      %vm395 = vcmask 385344
      %396 = vst.msk [vmem:[#allocation2 + $0x3] sm:$0x1] %vm395, %v390
      %v397 = vsel %vm378, %v337, %v315
      %v398 = vsel %vm338, %v343, %v340
      %399 = vrot.lane.b32.xlu0 %v397, 48
      %v400 = vpop.permute.xlu0 %399
      %401 = vrot.lane.b32.xlu0 %v398, 48
      %v402 = vpop.permute.xlu0 %401
      %vm405 = vcmask 458118
      %406 = vst.msk [vmem:[#allocation2 - $0x6] sm:$0xc0] %vm405, %v400
      %vm407 = vcmask 451968
      %408 = vst.msk [vmem:[#allocation2 + $0x2] sm:$0x3] %vm407, %v402
      %v409 = vsel %vm338, %v340, %v337
      %v410 = vsel %vm341, %v343, %v409
      %411 = vrot.lane.b32.xlu0 %v315, 56
      %v412 = vpop.permute.xlu0 %411
      %413 = vrot.lane.b32.xlu0 %v410, 56
      %v414 = vpop.permute.xlu0 %413
      %vm417 = vcmask 523719
      %418 = vst.msk [vmem:[#allocation2 - $0x7] sm:$0x80] %vm417, %v412
      %vm419 = vcmask 518592
      %420 = vst.msk [vmem:[#allocation2 + $0x1] sm:$0x7] %vm419, %v414
      %v421 = vld [vmem:[%s2] sm:$0xff]
      %v422 = vld [vmem:[#allocation2] sm:$0xf]
      %v423 = vld [vmem:[%s3] sm:$0xff]
      %425 = vset.pattern.permute.xlu0 0
      %426 = vperm.xlu0 %425, %v423
      %v427 = vpop.permute.xlu0 %426
      %vm429 = vcmask 31744
      %v431 = vsel %vm429, %v421, 0
      %vm433 = vcmask 1043456
      %v435 = vsel %vm433, %v422, 0
      %437 = vmatprep.subr.mxu0 0.0
      %438 = vmatpush1.msra.mxu0 0.0
      %439 = vmatprep.subr.mxu0 0.0
      %440 = vmatpush1.msra.mxu0 0.0
      %441 = vmatprep.subr.mxu0 0.0
      %442 = vmatpush1.msra.mxu0 0.0
      %443 = vmatprep.subr.mxu0 0.0
      %444 = vmatpush1.msra.mxu0 0.0
      %445 = vmatprep.subr.mxu0 0.0
      %446 = vmatpush1.msra.mxu0 0.0
      %447 = vmatprep.subr.mxu0 0.0
      %448 = vmatpush1.msra.mxu0 0.0
      %449 = vmatprep.subr.mxu0 0.0
      %450 = vmatpush1.msra.mxu0 0.0
      %451 = vmatprep.subr.mxu0 0.0
      %452 = vmatpush1.msra.mxu0 0.0
      %453 = vmatprep.subr.mxu0 0.0
      %454 = vmatpush1.msra.mxu0 0.0
      %455 = vmatprep.subr.mxu0 0.0
      %456 = vmatpush1.msra.mxu0 0.0
      %457 = vmatprep.subr.mxu0 0.0
      %458 = vmatpush1.msra.mxu0 0.0
      %459 = vmatprep.subr.mxu0 0.0
      %460 = vmatpush1.msra.mxu0 0.0
      %461 = vmatprep.subr.mxu0 0.0
      %462 = vmatpush1.msra.mxu0 0.0
      %463 = vmatprep.subr.mxu0 0.0
      %464 = vmatpush1.msra.mxu0 0.0
      %465 = vmatprep.subr.mxu0 0.0
      %466 = vmatpush1.msra.mxu0 0.0
      %467 = vmatprep.subr.mxu0 0.0
      %468 = vmatpush1.msra.mxu0 %v435
      %469 = vmatprep.subr.mxu0 0.0
      %470 = vmatpush2.msra.mxu0 0.0
      %471 = vmatprep.subr.mxu0 0.0
      %472 = vmatpush2.msra.mxu0 0.0
      %473 = vmatprep.subr.mxu0 0.0
      %474 = vmatpush2.msra.mxu0 0.0
      %475 = vmatprep.subr.mxu0 0.0
      %476 = vmatpush2.msra.mxu0 0.0
      %477 = vmatprep.subr.mxu0 0.0
      %478 = vmatpush2.msra.mxu0 0.0
      %479 = vmatprep.subr.mxu0 0.0
      %480 = vmatpush2.msra.mxu0 0.0
      %481 = vmatprep.subr.mxu0 0.0
      %482 = vmatpush2.msra.mxu0 0.0
      %483 = vmatprep.subr.mxu0 0.0
      %484 = vmatpush2.msra.mxu0 0.0
      %485 = vmatprep.subr.mxu0 0.0
      %486 = vmatpush2.msra.mxu0 0.0
      %487 = vmatprep.subr.mxu0 0.0
      %488 = vmatpush2.msra.mxu0 0.0
      %489 = vmatprep.subr.mxu0 0.0
      %490 = vmatpush2.msra.mxu0 0.0
      %491 = vmatprep.subr.mxu0 0.0
      %492 = vmatpush2.msra.mxu0 0.0
      %493 = vmatprep.subr.mxu0 0.0
      %494 = vmatpush2.msra.mxu0 0.0
      %495 = vmatprep.subr.mxu0 0.0
      %496 = vmatpush2.msra.mxu0 0.0
      %497 = vmatprep.subr.mxu0 0.0
      %498 = vmatpush2.msra.mxu0 0.0
      %499 = vmatprep.subr.mxu0 0.0
      %500 = vmatpush2.msra.mxu0 0.0
      %501 = vmatprep.mubr.f32.mxu0 0.0
      %502 = vmatmul.mubr.f32.gmra.mxu0 %v431
      %v503 = vpop.f32.mrf.mxu0
      %v504 = vadd.f32 %v427, %v503
      %v505 = vpop.f32.mrf.mxu0
      %506 = vdwg.mxu0
      %vm507 = vcmask 523264
      %508 = vst.msk [vmem:[%s226] sm:$0xff] %vm507, %v504
      %p509 = scmp.lt.s32.totalorder %s19, 1
      %s510 = scalar_select %p509, %s19, 1
      %p511 = scmp.lt.s32.totalorder %s20, 0
      %s512 = scalar_select %p511, %s20, 0
      %s513 = sadd.s32 %s512, %s510
      %s514 = smul.addr %s513, 8
      %s515 = scalar_lea.vmem %s4, %s514
      // Predicated region
      $region37: #{downsample.1} parent=35 // pred_check
        %p516 = pneg %p138
      $region38: #{downsample.1} parent=35 // pred_check_branch
        %518 = sbr.rel (%p516) target = $region40
      $region39: #{downsample.1} parent=35 // pred_region
        _
      $region40: #{downsample.1} parent=35 // pred_fallthru
        _
    $region36: #{downsample.1} parent=5 // pred_fallthru
      _
    %p519 = scmp.le.s32.totalorder 2, %s10
    // Predicated region
    $region41: #{downsample.1} parent=5 // pred_check
      %p520 = pneg %p519
    $region42: #{downsample.1} parent=5 // pred_check_branch
      %522 = sbr.rel (%p520) target = $region44
    $region43: #{downsample.1} parent=5 // pred_region
      %s523 = ssub.s32 %s10, 2
      // Predicated region
      $region45: #{downsample.1} parent=43 // pred_check
        %p524 = pneg %p144
      $region46: #{downsample.1} parent=43 // pred_check_branch
        %526 = sbr.rel (%p524) target = $region48
      $region47: #{downsample.1} parent=43 // pred_region
        %p527 = scmp.lt.s32.totalorder %s21, 1
        %s528 = scalar_select %p527, %s21, 1
        %p529 = scmp.lt.s32.totalorder %s22, 0
        %s530 = scalar_select %p529, %s22, 0
        %s531 = sadd.s32 %s530, %s528
        %s532 = smul.addr %s531, 8
        %s533 = scalar_lea.vmem %s4, %s532
      $region48: #{downsample.1} parent=43 // pred_fallthru
        _
    $region44: #{downsample.1} parent=5 // pred_fallthru
      _
  $region6: #{downsample.1} parent=0 // loop_footer
    %s14 = sadd.s32 1, %s10
  $region7: #{downsample.1} parent=0 // loop_footer_branch
    %9 = sbr.rel target = $region3
  $region8: #{downsample.1} parent=0 // loop_exit
    _

</llo_original>
